<compile_context>
chip_gen: v5e
topology: v5e:2x2
jax: 0.10.0
libtpu: 0.0.40
codegen_flags: <defaults>
</compile_context>

<pallas_src>
import math
from functools import partial

import jax
import jax.numpy as jnp
from jax.experimental import pallas as pl
from jax.experimental.pallas import tpu as pltpu

STD_MAX_NOISE = 1.0

H1_PAD = 384   # 300 -> 384 (3 * 128)
H2_PAD = 384   # 300 -> 384
H3_PAD = 256   # 200 -> 256 (2 * 128)


def _round_up(x, m):
    return ((x + m - 1) // m) * m


def _pad2(a, rows, cols):
    return jnp.pad(a, ((0, rows - a.shape[0]), (0, cols - a.shape[1])))


# ---------------------------------------------------------------------------
# Kernel
# ---------------------------------------------------------------------------
def policy_kernel(x_ref,
                  w1_ref, b1_ref,
                  w2_ref, b2_ref,
                  w3_ref, b3_ref,
                  wh_ref, bh_ref,
                  out_ref, *, actions):
    # bf16 operands on the MXU, f32 accumulation, f32 elementwise epilogue.
    h = jnp.dot(x_ref[...].astype(jnp.bfloat16), w1_ref[...],
                preferred_element_type=jnp.float32) + b1_ref[...]
    h = jnp.maximum(h, 0.0)

    h = jnp.dot(h.astype(jnp.bfloat16), w2_ref[...],
                preferred_element_type=jnp.float32) + b2_ref[...]
    h = jnp.maximum(h, 0.0)

    h = jnp.dot(h.astype(jnp.bfloat16), w3_ref[...],
                preferred_element_type=jnp.float32) + b3_ref[...]
    h = jnp.maximum(h, 0.0)

    # fused mean|std head: one lane-dense matmul, per-lane nonlinearity select.
    y = jnp.dot(h.astype(jnp.bfloat16), wh_ref[...],
                preferred_element_type=jnp.float32) + bh_ref[...]
    lane = jax.lax.broadcasted_iota(jnp.int32, y.shape, dimension=1)
    mean_all = jnp.tanh(y)
    std_all = 0.1 + (STD_MAX_NOISE - 0.1) * jax.nn.sigmoid(y)
    # lanes [0, actions)        -> tanh(mean logits)
    # lanes [actions, 2*actions) -> std transform; padding lanes are sliced off.
    out_ref[...] = jnp.where(lane < actions, mean_all, std_all)


# ---------------------------------------------------------------------------
# Parameter packing (pad + bf16 cast) and wrapper
# ---------------------------------------------------------------------------
def pack_params(params, observations, actions):
    obs_p = _round_up(max(observations, 1), 128)
    head_p = _round_up(max(2 * actions, 1), 128)

    wh = jnp.concatenate([params["wm"], params["ws"]], axis=1)   # (200, 2*actions)
    bh = jnp.concatenate([params["bm"], params["bs"]], axis=1)   # (1,   2*actions)

    packed = {
        "w1": _pad2(params["w1"], obs_p, H1_PAD).astype(jnp.bfloat16),
        "b1": _pad2(params["b1"], 1, H1_PAD),
        "w2": _pad2(params["w2"], H1_PAD, H2_PAD).astype(jnp.bfloat16),
        "b2": _pad2(params["b2"], 1, H2_PAD),
        "w3": _pad2(params["w3"], H2_PAD, H3_PAD).astype(jnp.bfloat16),
        "b3": _pad2(params["b3"], 1, H3_PAD),
        "wh": _pad2(wh, H3_PAD, head_p).astype(jnp.bfloat16),
        "bh": _pad2(bh, 1, head_p),
    }
    return packed, obs_p, head_p


def policy_net_forward(x, packed, observations, actions, obs_p, head_p):
    """x: (B, observations) float32 -> (mean, std), each (B, actions) float32."""
    B = x.shape[0]
    b_pad = _round_up(max(B, 1), 8)
    tb = b_pad if b_pad <= 512 else 512
    b_pad = _round_up(b_pad, tb)

    x_p = jnp.pad(x, ((0, b_pad - B), (0, obs_p - observations)))

    def w_spec(shape):
        # Weights/biases stay VMEM-resident across the batch grid (block idx fixed).
        return pl.BlockSpec(shape, lambda i: (0, 0))

    out = pl.pallas_call(
        partial(policy_kernel, actions=actions),
        out_shape=jax.ShapeDtypeStruct((b_pad, head_p), jnp.float32),
        grid=(b_pad // tb,),
        in_specs=[
            pl.BlockSpec((tb, obs_p), lambda i: (i, 0)),
            w_spec((obs_p, H1_PAD)), w_spec((1, H1_PAD)),
            w_spec((H1_PAD, H2_PAD)), w_spec((1, H2_PAD)),
            w_spec((H2_PAD, H3_PAD)), w_spec((1, H3_PAD)),
            w_spec((H3_PAD, head_p)), w_spec((1, head_p)),
        ],
        out_specs=pl.BlockSpec((tb, head_p), lambda i: (i, 0)),
        compiler_params=pltpu.CompilerParams(
            dimension_semantics=("parallel",)),  # v7x: shard batch over both TCs
    )(x_p,
      packed["w1"], packed["b1"],
      packed["w2"], packed["b2"],
      packed["w3"], packed["b3"],
      packed["wh"], packed["bh"])

    mean = out[:B, :actions]
    std = out[:B, actions:2 * actions]
    return mean, std


# ---------------------------------------------------------------------------
# Init (mimics torch.nn.Linear default: uniform +-1/sqrt(fan_in)) and reference
# ---------------------------------------------------------------------------
def init_linear_params(key, fan_in, fan_out):
    kw, kb = jax.random.split(key)
    bound = 1.0 / math.sqrt(fan_in)
    w = jax.random.uniform(kw, (fan_in, fan_out), jnp.float32, -bound, bound)
    b = jax.random.uniform(kb, (1, fan_out), jnp.float32, -bound, bound)
    return w, b


def init_policy_params(key, observations, actions):
    k1, k2, k3, k4, k5 = jax.random.split(key, 5)
    w1, b1 = init_linear_params(k1, observations, 300)
    w2, b2 = init_linear_params(k2, 300, 300)
    w3, b3 = init_linear_params(k3, 300, 200)
    wm, bm = init_linear_params(k4, 200, actions)
    ws, bs = init_linear_params(k5, 200, actions)
    return {"w1": w1, "b1": b1, "w2": w2, "b2": b2, "w3": w3, "b3": b3,
            "wm": wm, "bm": bm, "ws": ws, "bs": bs}


def policy_net_reference(x, p, dot_dtype=jnp.float32):
    """Pure-JAX reference; dot_dtype=bfloat16 reproduces the kernel arithmetic."""
    def lin(h, w, b):
        return jnp.dot(h.astype(dot_dtype), w.astype(dot_dtype),
                       preferred_element_type=jnp.float32) + b
    h = jnp.maximum(lin(x, p["w1"], p["b1"]), 0.0)
    h = jnp.maximum(lin(h, p["w2"], p["b2"]), 0.0)
    h = jnp.maximum(lin(h, p["w3"], p["b3"]), 0.0)
    mean = jnp.tanh(lin(h, p["wm"], p["bm"]))
    std = 0.1 + (STD_MAX_NOISE - 0.1) * jax.nn.sigmoid(lin(h, p["ws"], p["bs"]))
    return mean, std


if __name__ == "__main__":
    batch = 2
    observations = 32
    actions = 8

    key = jax.random.PRNGKey(0)
    key_params, key_x = jax.random.split(key)

    params = init_policy_params(key_params, observations, actions)
    x = jax.random.normal(key_x, (batch, observations), jnp.float32)

    packed, obs_p, head_p = pack_params(params, observations, actions)
    mean, std = policy_net_forward(x, packed, observations, actions, obs_p, head_p)
    jax.block_until_ready((mean, std))

    assert mean.shape == (batch, actions) and std.shape == (batch, actions)

    # bf16-weight reference (same arithmetic as the kernel): tight check.
    mean_bf16, std_bf16 = policy_net_reference(x, params, dot_dtype=jnp.bfloat16)
    assert jnp.allclose(mean, mean_bf16, atol=5e-3, rtol=5e-3), (
        float(jnp.max(jnp.abs(mean - mean_bf16))))
    assert jnp.allclose(std, std_bf16, atol=5e-3, rtol=5e-3), (
        float(jnp.max(jnp.abs(std - std_bf16))))

    # full-f32 reference: loose check that bf16 weight quantization stays small.
    mean_f32, std_f32 = policy_net_reference(x, params, dot_dtype=jnp.float32)
    assert jnp.allclose(mean, mean_f32, atol=5e-2, rtol=5e-2)
    assert jnp.allclose(std, std_f32, atol=5e-2, rtol=5e-2)

    print("KERNEL_OK")
</pallas_src>

<mosaic_0001>
module attributes {stable_mosaic.version = 11 : i64} {
  func.func @policy_kernel(%arg0: i32, %arg1: memref<8x128xf32, #tpu.memory_space<vmem>>, %arg2: memref<128x384xbf16, #tpu.memory_space<vmem>>, %arg3: memref<1x384xf32, #tpu.memory_space<vmem>>, %arg4: memref<384x384xbf16, #tpu.memory_space<vmem>>, %arg5: memref<1x384xf32, #tpu.memory_space<vmem>>, %arg6: memref<384x256xbf16, #tpu.memory_space<vmem>>, %arg7: memref<1x256xf32, #tpu.memory_space<vmem>>, %arg8: memref<256x128xbf16, #tpu.memory_space<vmem>>, %arg9: memref<1x128xf32, #tpu.memory_space<vmem>>, %arg10: memref<8x128xf32, #tpu.memory_space<vmem>>) attributes {dimension_semantics = [#tpu.dimension_semantics<parallel>], iteration_bounds = array<i64: 1>, scalar_prefetch = 0 : i64, scratch_operands = 0 : i64, tpu.core_type = #tpu.core_type<tc>, window_params = [{transform_indices = @transform_0, window_bounds = array<i64: 8, 128>}, {pipeline_mode = #tpu.pipeline_mode<synchronous>, transform_indices = @transform_1, window_bounds = array<i64: 128, 384>}, {pipeline_mode = #tpu.pipeline_mode<synchronous>, transform_indices = @transform_2, window_bounds = array<i64: 1, 384>}, {pipeline_mode = #tpu.pipeline_mode<synchronous>, transform_indices = @transform_3, window_bounds = array<i64: 384, 384>}, {pipeline_mode = #tpu.pipeline_mode<synchronous>, transform_indices = @transform_4, window_bounds = array<i64: 1, 384>}, {pipeline_mode = #tpu.pipeline_mode<synchronous>, transform_indices = @transform_5, window_bounds = array<i64: 384, 256>}, {pipeline_mode = #tpu.pipeline_mode<synchronous>, transform_indices = @transform_6, window_bounds = array<i64: 1, 256>}, {pipeline_mode = #tpu.pipeline_mode<synchronous>, transform_indices = @transform_7, window_bounds = array<i64: 256, 128>}, {pipeline_mode = #tpu.pipeline_mode<synchronous>, transform_indices = @transform_8, window_bounds = array<i64: 1, 128>}, {transform_indices = @transform_9, window_bounds = array<i64: 8, 128>}]} {
    %c0 = arith.constant 0 : index
    %c0_0 = arith.constant 0 : index
    %0 = vector.load %arg1[%c0, %c0_0] : memref<8x128xf32, #tpu.memory_space<vmem>>, vector<8x128xf32>
    %1 = arith.truncf %0 : vector<8x128xf32> to vector<8x128xbf16>
    %c0_1 = arith.constant 0 : index
    %c0_2 = arith.constant 0 : index
    %2 = vector.load %arg2[%c0_1, %c0_2] : memref<128x384xbf16, #tpu.memory_space<vmem>>, vector<128x384xbf16>
    %cst = arith.constant dense<0.000000e+00> : vector<8x384xf32>
    %3 = tpu.matmul %1, %2, %cst {dimension_numbers = #tpu.dot_dimension_numbers<[1], [0], [0], [1], [0, 0, 1, 1], [], []>} : vector<8x128xbf16>, vector<128x384xbf16>, vector<8x384xf32> -> vector<8x384xf32>
    %c0_3 = arith.constant 0 : index
    %c0_4 = arith.constant 0 : index
    %4 = vector.load %arg3[%c0_3, %c0_4] : memref<1x384xf32, #tpu.memory_space<vmem>>, vector<1x384xf32>
    %5 = vector.broadcast %4 : vector<1x384xf32> to vector<8x384xf32>
    %6 = arith.addf %3, %5 : vector<8x384xf32>
    %cst_5 = arith.constant 0.000000e+00 : f32
    %7 = vector.broadcast %cst_5 : f32 to vector<8x384xf32>
    %8 = arith.maximumf %6, %7 : vector<8x384xf32>
    %9 = arith.truncf %8 : vector<8x384xf32> to vector<8x384xbf16>
    %c0_6 = arith.constant 0 : index
    %c0_7 = arith.constant 0 : index
    %10 = vector.load %arg4[%c0_6, %c0_7] : memref<384x384xbf16, #tpu.memory_space<vmem>>, vector<384x384xbf16>
    %cst_8 = arith.constant dense<0.000000e+00> : vector<8x384xf32>
    %11 = tpu.matmul %9, %10, %cst_8 {dimension_numbers = #tpu.dot_dimension_numbers<[1], [0], [0], [1], [0, 0, 1, 1], [], []>} : vector<8x384xbf16>, vector<384x384xbf16>, vector<8x384xf32> -> vector<8x384xf32>
    %c0_9 = arith.constant 0 : index
    %c0_10 = arith.constant 0 : index
    %12 = vector.load %arg5[%c0_9, %c0_10] : memref<1x384xf32, #tpu.memory_space<vmem>>, vector<1x384xf32>
    %13 = vector.broadcast %12 : vector<1x384xf32> to vector<8x384xf32>
    %14 = arith.addf %11, %13 : vector<8x384xf32>
    %cst_11 = arith.constant 0.000000e+00 : f32
    %15 = vector.broadcast %cst_11 : f32 to vector<8x384xf32>
    %16 = arith.maximumf %14, %15 : vector<8x384xf32>
    %17 = arith.truncf %16 : vector<8x384xf32> to vector<8x384xbf16>
    %c0_12 = arith.constant 0 : index
    %c0_13 = arith.constant 0 : index
    %18 = vector.load %arg6[%c0_12, %c0_13] : memref<384x256xbf16, #tpu.memory_space<vmem>>, vector<384x256xbf16>
    %cst_14 = arith.constant dense<0.000000e+00> : vector<8x256xf32>
    %19 = tpu.matmul %17, %18, %cst_14 {dimension_numbers = #tpu.dot_dimension_numbers<[1], [0], [0], [1], [0, 0, 1, 1], [], []>} : vector<8x384xbf16>, vector<384x256xbf16>, vector<8x256xf32> -> vector<8x256xf32>
    %c0_15 = arith.constant 0 : index
    %c0_16 = arith.constant 0 : index
    %20 = vector.load %arg7[%c0_15, %c0_16] : memref<1x256xf32, #tpu.memory_space<vmem>>, vector<1x256xf32>
    %21 = vector.broadcast %20 : vector<1x256xf32> to vector<8x256xf32>
    %22 = arith.addf %19, %21 : vector<8x256xf32>
    %cst_17 = arith.constant 0.000000e+00 : f32
    %23 = vector.broadcast %cst_17 : f32 to vector<8x256xf32>
    %24 = arith.maximumf %22, %23 : vector<8x256xf32>
    %25 = arith.truncf %24 : vector<8x256xf32> to vector<8x256xbf16>
    %c0_18 = arith.constant 0 : index
    %c0_19 = arith.constant 0 : index
    %26 = vector.load %arg8[%c0_18, %c0_19] : memref<256x128xbf16, #tpu.memory_space<vmem>>, vector<256x128xbf16>
    %cst_20 = arith.constant dense<0.000000e+00> : vector<8x128xf32>
    %27 = tpu.matmul %25, %26, %cst_20 {dimension_numbers = #tpu.dot_dimension_numbers<[1], [0], [0], [1], [0, 0, 1, 1], [], []>} : vector<8x256xbf16>, vector<256x128xbf16>, vector<8x128xf32> -> vector<8x128xf32>
    %c0_21 = arith.constant 0 : index
    %c0_22 = arith.constant 0 : index
    %28 = vector.load %arg9[%c0_21, %c0_22] : memref<1x128xf32, #tpu.memory_space<vmem>>, vector<1x128xf32>
    %29 = vector.broadcast %28 : vector<1x128xf32> to vector<8x128xf32>
    %30 = arith.addf %27, %29 : vector<8x128xf32>
    %31 = tpu.iota {dimensions = array<i32: 1>} : vector<8x128xi32>
    %32 = math.tanh %30 : vector<8x128xf32>
    %33 = arith.negf %30 : vector<8x128xf32>
    %34 = math.exp %33 : vector<8x128xf32>
    %cst_23 = arith.constant 1.000000e+00 : f32
    %35 = vector.broadcast %cst_23 : f32 to vector<8x128xf32>
    %36 = arith.addf %35, %34 : vector<8x128xf32>
    %37 = arith.divf %35, %36 : vector<8x128xf32>
    %cst_24 = arith.constant 0.899999976 : f32
    %38 = vector.broadcast %cst_24 : f32 to vector<8x128xf32>
    %39 = arith.mulf %38, %37 : vector<8x128xf32>
    %cst_25 = arith.constant 1.000000e-01 : f32
    %40 = vector.broadcast %cst_25 : f32 to vector<8x128xf32>
    %41 = arith.addf %40, %39 : vector<8x128xf32>
    %c8_i32 = arith.constant 8 : i32
    %42 = vector.broadcast %c8_i32 : i32 to vector<8x128xi32>
    %43 = arith.cmpi slt, %31, %42 : vector<8x128xi32>
    %44 = arith.select %43, %32, %41 : vector<8x128xi1>, vector<8x128xf32>
    %c0_26 = arith.constant 0 : index
    %c0_27 = arith.constant 0 : index
    %45 = vector.load %arg10[%c0_26, %c0_27] : memref<8x128xf32, #tpu.memory_space<vmem>>, vector<8x128xf32>
    tpu.vector_store %arg10[%c0_26, %c0_27], %44 {strides = array<i32>} : memref<8x128xf32, #tpu.memory_space<vmem>>, vector<8x128xf32>,
    return
  }
  func.func @transform_0(%arg0: i32) -> (i32, i32) {
    %c0_i32 = arith.constant 0 : i32
    %c0_i32_0 = arith.constant 0 : i32
    return %arg0, %c0_i32 : i32, i32
  }
  func.func @transform_1(%arg0: i32) -> (i32, i32) {
    %c0_i32 = arith.constant 0 : i32
    %c0_i32_0 = arith.constant 0 : i32
    %c0_i32_1 = arith.constant 0 : i32
    return %c0_i32, %c0_i32_0 : i32, i32
  }
  func.func @transform_2(%arg0: i32) -> (i32, i32) {
    %c0_i32 = arith.constant 0 : i32
    %c0_i32_0 = arith.constant 0 : i32
    %c0_i32_1 = arith.constant 0 : i32
    return %c0_i32, %c0_i32_0 : i32, i32
  }
  func.func @transform_3(%arg0: i32) -> (i32, i32) {
    %c0_i32 = arith.constant 0 : i32
    %c0_i32_0 = arith.constant 0 : i32
    %c0_i32_1 = arith.constant 0 : i32
    return %c0_i32, %c0_i32_0 : i32, i32
  }
  func.func @transform_4(%arg0: i32) -> (i32, i32) {
    %c0_i32 = arith.constant 0 : i32
    %c0_i32_0 = arith.constant 0 : i32
    %c0_i32_1 = arith.constant 0 : i32
    return %c0_i32, %c0_i32_0 : i32, i32
  }
  func.func @transform_5(%arg0: i32) -> (i32, i32) {
    %c0_i32 = arith.constant 0 : i32
    %c0_i32_0 = arith.constant 0 : i32
    %c0_i32_1 = arith.constant 0 : i32
    return %c0_i32, %c0_i32_0 : i32, i32
  }
  func.func @transform_6(%arg0: i32) -> (i32, i32) {
    %c0_i32 = arith.constant 0 : i32
    %c0_i32_0 = arith.constant 0 : i32
    %c0_i32_1 = arith.constant 0 : i32
    return %c0_i32, %c0_i32_0 : i32, i32
  }
  func.func @transform_7(%arg0: i32) -> (i32, i32) {
    %c0_i32 = arith.constant 0 : i32
    %c0_i32_0 = arith.constant 0 : i32
    %c0_i32_1 = arith.constant 0 : i32
    return %c0_i32, %c0_i32_0 : i32, i32
  }
  func.func @transform_8(%arg0: i32) -> (i32, i32) {
    %c0_i32 = arith.constant 0 : i32
    %c0_i32_0 = arith.constant 0 : i32
    %c0_i32_1 = arith.constant 0 : i32
    return %c0_i32, %c0_i32_0 : i32, i32
  }
  func.func @transform_9(%arg0: i32) -> (i32, i32) {
    %c0_i32 = arith.constant 0 : i32
    %c0_i32_0 = arith.constant 0 : i32
    return %arg0, %c0_i32 : i32, i32
  }
}

</mosaic_0001>

<llo_original>
// kernel: tpu_custom_call.1
$region0: #{tpu_custom_call.1}
  #allocation0 [shape = 'u32[]', space=smem, size = 0x4, offset = 0x4, fixed_abs, tag = 'smem constant byte address 0x4 - core index']
  #allocation1 [shape = 'u32[72,128]{1,0:T(1,128)}', space=vmem, size = 0x9000, scoped, tag = 'internal scratch']
  %s0 = inlined_call_operand.hbm [shape: f32[8,128], index: 0, kind: input, shape index: {}]
  %s1 = inlined_call_operand.hbm [shape: bf16[128,384], index: 1, kind: input, shape index: {}]
  %s2 = inlined_call_operand.hbm [shape: f32[1,384], index: 2, kind: input, shape index: {}]
  %s3 = inlined_call_operand.hbm [shape: bf16[384,384], index: 3, kind: input, shape index: {}]
  %s4 = inlined_call_operand.vmem [shape: f32[1,384], index: 4, kind: input, shape index: {}]
  %s5 = inlined_call_operand.hbm [shape: bf16[384,256], index: 5, kind: input, shape index: {}]
  %s6 = inlined_call_operand.vmem [shape: f32[1,256], index: 6, kind: input, shape index: {}]
  %s7 = inlined_call_operand.hbm [shape: bf16[256,128], index: 7, kind: input, shape index: {}]
  %s8 = inlined_call_operand.vmem [shape: f32[1,128], index: 8, kind: input, shape index: {}]
  %s9 = inlined_call_operand.hbm [shape: f32[8,128], index: 9, kind: output, shape index: {}]
  %s10 = sld [smem:[#allocation0]]
  $region70: #{tpu_custom_call.1} parent=0
    _
  %s12 = ssub.s32 1, %s10
  %s13 = scalar_select 0, %s12, %s10
  $region1: #{tpu_custom_call.1} parent=0
    #allocation2 [shape = 'u8[4096]{0}', space=vmem, size = 0x1000, scoped, tag = 'input window, operand 0, single buffered']
    #allocation3 [shape = 's32[1]{0}', space=sflag, size = 0x4, scoped, tag = 'scoped memory for tpu_custom_call.1']
    #allocation4 [shape = 's32[1]{0}', space=sflag, size = 0x4, scoped, tag = 'scoped memory for tpu_custom_call.1']
    #allocation5 [shape = 'u8[98304]{0}', space=vmem, size = 0x18000, scoped, tag = 'input window, operand 1, single buffered']
    #allocation6 [shape = 's32[1]{0}', space=sflag, size = 0x4, scoped, tag = 'scoped memory for tpu_custom_call.1']
    #allocation7 [shape = 'u8[1536]{0}', space=vmem, size = 0x800, scoped, tag = 'input window, operand 2, single buffered']
    #allocation8 [shape = 'u8[294912]{0}', space=vmem, size = 0x48000, scoped, tag = 'input window, operand 3, single buffered']
    #allocation9 [shape = 's32[1]{0}', space=sflag, size = 0x4, scoped, tag = 'scoped memory for tpu_custom_call.1']
    #allocation10 [shape = 'u8[196608]{0}', space=vmem, size = 0x30000, scoped, tag = 'input window, operand 5, single buffered']
    #allocation11 [shape = 'u8[65536]{0}', space=vmem, size = 0x10000, scoped, tag = 'input window, operand 7, single buffered']
    #allocation12 [shape = 's32[1]{0}', space=sflag, size = 0x4, scoped, tag = 'scoped memory for tpu_custom_call.1']
    #allocation13 [shape = 'u8[4096]{0}', space=vmem, size = 0x1000, scoped, tag = 'output window, operand 0, single buffered']
    %14 = vsyncpa [#allocation3], 0
    %15 = vsyncpa [#allocation6], 0
    %16 = vsyncpa [#allocation9], 0
    %17 = vsyncpa [#allocation12], 0
    %18 = vsyncpa [#allocation4], 0
    // Predicated region
    $region2: #{tpu_custom_call.1} parent=1 // pred_check
      _
    $region3: #{tpu_custom_call.1} parent=1 // pred_check_branch
      %20 = sbr.rel (0) target = $region5
    $region4: #{tpu_custom_call.1} parent=1 // pred_region
      %22 = vsyncadd [#allocation3], 0
      %s24 = sshll.u32 %s0, 4
      %s25 = int_to_ptr.hbm [resolvable:$true] %s24
      %s26 = sshll.u32 [#allocation2], 4
      %s27 = int_to_ptr.vmem [resolvable:$true] %s26
      %29 = dma.hbm_to_vmem [thread:$0]  %s25, 128, %s27, [#allocation3]
    $region5: #{tpu_custom_call.1} parent=1 // pred_fallthru
      _
    // Predicated region
    $region6: #{tpu_custom_call.1} parent=1 // pred_check
      _
    $region7: #{tpu_custom_call.1} parent=1 // pred_check_branch
      %31 = sbr.rel (0) target = $region9
    $region8: #{tpu_custom_call.1} parent=1 // pred_region
      %33 = vsyncadd [#allocation6], 0
      %s34 = sshll.u32 %s1, 4
      %s35 = int_to_ptr.hbm [resolvable:$true] %s34
      %s36 = sshll.u32 [#allocation5], 4
      %s37 = int_to_ptr.vmem [resolvable:$true] %s36
      %42 = dma.hbm_to_vmem [thread:$0]  %s35, 3072, %s37, [#allocation6], 192, 192, 12
    $region9: #{tpu_custom_call.1} parent=1 // pred_fallthru
      _
    // Predicated region
    $region10: #{tpu_custom_call.1} parent=1 // pred_check
      _
    $region11: #{tpu_custom_call.1} parent=1 // pred_check_branch
      %44 = sbr.rel (0) target = $region13
    $region12: #{tpu_custom_call.1} parent=1 // pred_region
      %46 = vsyncadd [#allocation6], 0
      %s48 = sshll.u32 %s2, 4
      %s49 = int_to_ptr.hbm [resolvable:$true] %s48
      %s50 = sshll.u32 [#allocation7], 4
      %s51 = int_to_ptr.vmem [resolvable:$true] %s50
      %53 = dma.hbm_to_vmem [thread:$0]  %s49, 48, %s51, [#allocation6]
    $region13: #{tpu_custom_call.1} parent=1 // pred_fallthru
      _
    // Predicated region
    $region14: #{tpu_custom_call.1} parent=1 // pred_check
      _
    $region15: #{tpu_custom_call.1} parent=1 // pred_check_branch
      %55 = sbr.rel (0) target = $region17
    $region16: #{tpu_custom_call.1} parent=1 // pred_region
      %57 = vsyncadd [#allocation9], 0
      %s58 = sshll.u32 %s3, 4
      %s59 = int_to_ptr.hbm [resolvable:$true] %s58
      %s60 = sshll.u32 [#allocation8], 4
      %s61 = int_to_ptr.vmem [resolvable:$true] %s60
      %66 = dma.hbm_to_vmem [thread:$0]  %s59, 9216, %s61, [#allocation9], 192, 192, 12
    $region17: #{tpu_custom_call.1} parent=1 // pred_fallthru
      _
    // Predicated region
    $region18: #{tpu_custom_call.1} parent=1 // pred_check
      _
    $region19: #{tpu_custom_call.1} parent=1 // pred_check_branch
      %68 = sbr.rel (0) target = $region21
    $region20: #{tpu_custom_call.1} parent=1 // pred_region
      _
    $region21: #{tpu_custom_call.1} parent=1 // pred_fallthru
      _
    // Predicated region
    $region22: #{tpu_custom_call.1} parent=1 // pred_check
      _
    $region23: #{tpu_custom_call.1} parent=1 // pred_check_branch
      %70 = sbr.rel (0) target = $region25
    $region24: #{tpu_custom_call.1} parent=1 // pred_region
      %72 = vsyncadd [#allocation9], 0
      %s73 = sshll.u32 %s5, 4
      %s74 = int_to_ptr.hbm [resolvable:$true] %s73
      %s75 = sshll.u32 [#allocation10], 4
      %s76 = int_to_ptr.vmem [resolvable:$true] %s75
      %81 = dma.hbm_to_vmem [thread:$0]  %s74, 6144, %s76, [#allocation9], 128, 128, 8
    $region25: #{tpu_custom_call.1} parent=1 // pred_fallthru
      _
    // Predicated region
    $region26: #{tpu_custom_call.1} parent=1 // pred_check
      _
    $region27: #{tpu_custom_call.1} parent=1 // pred_check_branch
      %83 = sbr.rel (0) target = $region29
    $region28: #{tpu_custom_call.1} parent=1 // pred_region
      _
    $region29: #{tpu_custom_call.1} parent=1 // pred_fallthru
      _
    // Predicated region
    $region30: #{tpu_custom_call.1} parent=1 // pred_check
      _
    $region31: #{tpu_custom_call.1} parent=1 // pred_check_branch
      %85 = sbr.rel (0) target = $region33
    $region32: #{tpu_custom_call.1} parent=1 // pred_region
      %87 = vsyncadd [#allocation12], 0
      %s88 = sshll.u32 %s7, 4
      %s89 = int_to_ptr.hbm [resolvable:$true] %s88
      %s90 = sshll.u32 [#allocation11], 4
      %s91 = int_to_ptr.vmem [resolvable:$true] %s90
      %96 = dma.hbm_to_vmem [thread:$0]  %s89, 2048, %s91, [#allocation12], 64, 64, 4
    $region33: #{tpu_custom_call.1} parent=1 // pred_fallthru
      _
    // Predicated region
    $region34: #{tpu_custom_call.1} parent=1 // pred_check
      _
    $region35: #{tpu_custom_call.1} parent=1 // pred_check_branch
      %98 = sbr.rel (0) target = $region37
    $region36: #{tpu_custom_call.1} parent=1 // pred_region
      _
    $region37: #{tpu_custom_call.1} parent=1 // pred_fallthru
      _
    // Predicated region
    $region38: #{tpu_custom_call.1} parent=1 // pred_check
      _
    $region39: #{tpu_custom_call.1} parent=1 // pred_check_branch
      %100 = sbr.rel (0) target = $region41
    $region40: #{tpu_custom_call.1} parent=1 // pred_region
      %102 = dma.done [#allocation3], 128
    $region41: #{tpu_custom_call.1} parent=1 // pred_fallthru
      _
    // Predicated region
    $region42: #{tpu_custom_call.1} parent=1 // pred_check
      _
    $region43: #{tpu_custom_call.1} parent=1 // pred_check_branch
      %104 = sbr.rel (0) target = $region45
    $region44: #{tpu_custom_call.1} parent=1 // pred_region
      %106 = dma.done [#allocation6], 3072
    $region45: #{tpu_custom_call.1} parent=1 // pred_fallthru
      _
    // Predicated region
    $region46: #{tpu_custom_call.1} parent=1 // pred_check
      _
    $region47: #{tpu_custom_call.1} parent=1 // pred_check_branch
      %108 = sbr.rel (0) target = $region49
    $region48: #{tpu_custom_call.1} parent=1 // pred_region
      %110 = dma.done [#allocation6], 48
    $region49: #{tpu_custom_call.1} parent=1 // pred_fallthru
      _
    // Predicated region
    $region50: #{tpu_custom_call.1} parent=1 // pred_check
      _
    $region51: #{tpu_custom_call.1} parent=1 // pred_check_branch
      %112 = sbr.rel (0) target = $region53
    $region52: #{tpu_custom_call.1} parent=1 // pred_region
      %114 = dma.done [#allocation9], 9216
    $region53: #{tpu_custom_call.1} parent=1 // pred_fallthru
      _
    // Predicated region
    $region54: #{tpu_custom_call.1} parent=1 // pred_check
      _
    $region55: #{tpu_custom_call.1} parent=1 // pred_check_branch
      %116 = sbr.rel (0) target = $region57
    $region56: #{tpu_custom_call.1} parent=1 // pred_region
      %118 = dma.done [#allocation9], 6144
    $region57: #{tpu_custom_call.1} parent=1 // pred_fallthru
      _
    // Predicated region
    $region58: #{tpu_custom_call.1} parent=1 // pred_check
      _
    $region59: #{tpu_custom_call.1} parent=1 // pred_check_branch
      %120 = sbr.rel (0) target = $region61
    $region60: #{tpu_custom_call.1} parent=1 // pred_region
      %122 = dma.done [#allocation12], 2048
    $region61: #{tpu_custom_call.1} parent=1 // pred_fallthru
      _
    %v123 = vld [vmem:[#allocation2] sm:$0xff]
    %v124 = vpack.c.bf16 %v123, %v123
    %v125 = vld [vmem:[#allocation5] sm:$0xff]
    %v126 = vld [vmem:[#allocation5 + $0x8] sm:$0xf]
    %v127 = vld [vmem:[#allocation5 + $0xc] sm:$0xff]
    %v128 = vld [vmem:[#allocation5 + $0x14] sm:$0xf]
    %v129 = vld [vmem:[#allocation5 + $0x18] sm:$0xff]
    %v130 = vld [vmem:[#allocation5 + $0x20] sm:$0xf]
    %v131 = vld [vmem:[#allocation5 + $0x24] sm:$0xff]
    %v132 = vld [vmem:[#allocation5 + $0x2c] sm:$0xf]
    %v133 = vld [vmem:[#allocation5 + $0x30] sm:$0xff]
    %v134 = vld [vmem:[#allocation5 + $0x38] sm:$0xf]
    %v135 = vld [vmem:[#allocation5 + $0x3c] sm:$0xff]
    %v136 = vld [vmem:[#allocation5 + $0x44] sm:$0xf]
    %v137 = vld [vmem:[#allocation5 + $0x48] sm:$0xff]
    %v138 = vld [vmem:[#allocation5 + $0x50] sm:$0xf]
    %v139 = vld [vmem:[#allocation5 + $0x54] sm:$0xff]
    %v140 = vld [vmem:[#allocation5 + $0x5c] sm:$0xf]
    %v141 = vld [vmem:[#allocation5 + $0x60] sm:$0xff]
    %v142 = vld [vmem:[#allocation5 + $0x68] sm:$0xf]
    %v143 = vld [vmem:[#allocation5 + $0x6c] sm:$0xff]
    %v144 = vld [vmem:[#allocation5 + $0x74] sm:$0xf]
    %v145 = vld [vmem:[#allocation5 + $0x78] sm:$0xff]
    %v146 = vld [vmem:[#allocation5 + $0x80] sm:$0xf]
    %v147 = vld [vmem:[#allocation5 + $0x84] sm:$0xff]
    %v148 = vld [vmem:[#allocation5 + $0x8c] sm:$0xf]
    %v149 = vld [vmem:[#allocation5 + $0x90] sm:$0xff]
    %v150 = vld [vmem:[#allocation5 + $0x98] sm:$0xf]
    %v151 = vld [vmem:[#allocation5 + $0x9c] sm:$0xff]
    %v152 = vld [vmem:[#allocation5 + $0xa4] sm:$0xf]
    %v153 = vld [vmem:[#allocation5 + $0xa8] sm:$0xff]
    %v154 = vld [vmem:[#allocation5 + $0xb0] sm:$0xf]
    %v155 = vld [vmem:[#allocation5 + $0xb4] sm:$0xff]
    %v156 = vld [vmem:[#allocation5 + $0xbc] sm:$0xf]
    %v157 = vld [vmem:[#allocation7] sm:$0x7]
    %v159 = vperm.slane %v157, 0
    %v160 = vperm.slane %v157, 1
    %v161 = vperm.slane %v157, 2
    %v197 = vunpack.c.l.b16 %v125
    %v198 = vunpack.c.h.b16 %v125
    %v199 = vunpack.c.l.b16 %v126
    %v200 = vunpack.c.l.b16 %v127
    %v201 = vunpack.c.h.b16 %v127
    %v202 = vunpack.c.l.b16 %v128
    %v203 = vunpack.c.l.b16 %v129
    %v204 = vunpack.c.h.b16 %v129
    %v205 = vunpack.c.l.b16 %v130
    %v206 = vunpack.c.l.b16 %v131
    %v207 = vunpack.c.h.b16 %v131
    %v208 = vunpack.c.l.b16 %v132
    %v209 = vunpack.c.l.b16 %v133
    %v210 = vunpack.c.h.b16 %v133
    %v211 = vunpack.c.l.b16 %v134
    %v212 = vunpack.c.l.b16 %v135
    %v213 = vunpack.c.h.b16 %v135
    %v214 = vunpack.c.l.b16 %v136
    %v215 = vunpack.c.l.b16 %v137
    %v216 = vunpack.c.h.b16 %v137
    %v217 = vunpack.c.l.b16 %v138
    %v218 = vunpack.c.l.b16 %v139
    %v219 = vunpack.c.h.b16 %v139
    %v220 = vunpack.c.l.b16 %v140
    %v221 = vunpack.c.l.b16 %v141
    %v222 = vunpack.c.h.b16 %v141
    %v223 = vunpack.c.l.b16 %v142
    %v224 = vunpack.c.l.b16 %v143
    %v225 = vunpack.c.h.b16 %v143
    %v226 = vunpack.c.l.b16 %v144
    %v227 = vunpack.c.l.b16 %v145
    %v228 = vunpack.c.h.b16 %v145
    %v229 = vunpack.c.l.b16 %v146
    %v230 = vunpack.c.l.b16 %v147
    %v231 = vunpack.c.h.b16 %v147
    %v232 = vunpack.c.l.b16 %v148
    %v233 = vunpack.c.l.b16 %v149
    %v234 = vunpack.c.h.b16 %v149
    %v235 = vunpack.c.l.b16 %v150
    %v236 = vunpack.c.l.b16 %v151
    %v237 = vunpack.c.h.b16 %v151
    %v238 = vunpack.c.l.b16 %v152
    %v239 = vunpack.c.l.b16 %v153
    %v240 = vunpack.c.h.b16 %v153
    %v241 = vunpack.c.l.b16 %v154
    %v242 = vunpack.c.l.b16 %v155
    %v243 = vunpack.c.h.b16 %v155
    %v244 = vunpack.c.l.b16 %v156
    %v245 = vpack.c.b16 %v200, %v197
    %v246 = vpack.c.b16 %v201, %v198
    %v247 = vpack.c.b16 %v202, %v199
    %v248 = vpack.c.b16 %v206, %v203
    %v249 = vpack.c.b16 %v207, %v204
    %v250 = vpack.c.b16 %v208, %v205
    %v251 = vpack.c.b16 %v212, %v209
    %v252 = vpack.c.b16 %v213, %v210
    %v253 = vpack.c.b16 %v214, %v211
    %v254 = vpack.c.b16 %v218, %v215
    %v255 = vpack.c.b16 %v219, %v216
    %v256 = vpack.c.b16 %v220, %v217
    %v257 = vpack.c.b16 %v224, %v221
    %v258 = vpack.c.b16 %v225, %v222
    %v259 = vpack.c.b16 %v226, %v223
    %v260 = vpack.c.b16 %v230, %v227
    %v261 = vpack.c.b16 %v231, %v228
    %v262 = vpack.c.b16 %v232, %v229
    %v263 = vpack.c.b16 %v236, %v233
    %v264 = vpack.c.b16 %v237, %v234
    %v265 = vpack.c.b16 %v238, %v235
    %v266 = vpack.c.b16 %v242, %v239
    %v267 = vpack.c.b16 %v243, %v240
    %v268 = vpack.c.b16 %v244, %v241
    %293 = vmatpush.bf16.msra.mxu0 %v266
    %294 = vmatpush.bf16.msra.mxu0 %v263
    %295 = vmatpush.bf16.msra.mxu0 %v260
    %296 = vmatpush.bf16.msra.mxu0 %v257
    %297 = vmatpush.bf16.msra.mxu0 %v254
    %298 = vmatpush.bf16.msra.mxu0 %v251
    %299 = vmatpush.bf16.msra.mxu0 %v248
    %300 = vmatpush.bf16.msra.mxu0 %v245
    %301 = vmatmul.bf16.gmra.mxu0 %v124
    %v302 = vpop.f32.mrf.mxu0
    %v303 = vadd.f32 %v159, %v302
    %v304 = vpop.f32.mrf.mxu0
    %305 = vdwg.mxu0
    %306 = vmatpush.bf16.msra.mxu0 %v267
    %307 = vmatpush.bf16.msra.mxu0 %v264
    %308 = vmatpush.bf16.msra.mxu0 %v261
    %309 = vmatpush.bf16.msra.mxu0 %v258
    %310 = vmatpush.bf16.msra.mxu0 %v255
    %311 = vmatpush.bf16.msra.mxu0 %v252
    %312 = vmatpush.bf16.msra.mxu0 %v249
    %313 = vmatpush.bf16.msra.mxu0 %v246
    %314 = vmatmul.bf16.gmra.mxu0 %v124
    %v315 = vpop.f32.mrf.mxu0
    %v316 = vadd.f32 %v160, %v315
    %v317 = vpop.f32.mrf.mxu0
    %318 = vdwg.mxu0
    %319 = vmatpush.bf16.msra.mxu0 %v268
    %320 = vmatpush.bf16.msra.mxu0 %v265
    %321 = vmatpush.bf16.msra.mxu0 %v262
    %322 = vmatpush.bf16.msra.mxu0 %v259
    %323 = vmatpush.bf16.msra.mxu0 %v256
    %324 = vmatpush.bf16.msra.mxu0 %v253
    %325 = vmatpush.bf16.msra.mxu0 %v250
    %326 = vmatpush.bf16.msra.mxu0 %v247
    %327 = vmatmul.bf16.gmra.mxu0 %v124
    %v328 = vpop.f32.mrf.mxu0
    %v329 = vadd.f32 %v161, %v328
    %v330 = vpop.f32.mrf.mxu0
    %331 = vdwg.mxu0
    %v332 = vmax.f32 %v303, 0.0
    %v333 = vmax.f32 %v316, 0.0
    %v334 = vmax.f32 %v329, 0.0
    %v335 = vpack.c.bf16 %v332, %v332
    %v336 = vpack.c.bf16 %v333, %v333
    %v337 = vpack.c.bf16 %v334, %v334
    %v338 = vld [vmem:[#allocation8] sm:$0xff]
    %v339 = vld [vmem:[#allocation8 + $0x8] sm:$0xf]
    %v340 = vld [vmem:[#allocation8 + $0xc] sm:$0xff]
    %v341 = vld [vmem:[#allocation8 + $0x14] sm:$0xf]
    %v342 = vld [vmem:[#allocation8 + $0x18] sm:$0xff]
    %v343 = vld [vmem:[#allocation8 + $0x20] sm:$0xf]
    %v344 = vld [vmem:[#allocation8 + $0x24] sm:$0xff]
    %v345 = vld [vmem:[#allocation8 + $0x2c] sm:$0xf]
    %v346 = vld [vmem:[#allocation8 + $0x30] sm:$0xff]
    %v347 = vld [vmem:[#allocation8 + $0x38] sm:$0xf]
    %v348 = vld [vmem:[#allocation8 + $0x3c] sm:$0xff]
    %v349 = vld [vmem:[#allocation8 + $0x44] sm:$0xf]
    %v350 = vld [vmem:[#allocation8 + $0x48] sm:$0xff]
    %v351 = vld [vmem:[#allocation8 + $0x50] sm:$0xf]
    %v352 = vld [vmem:[#allocation8 + $0x54] sm:$0xff]
    %v353 = vld [vmem:[#allocation8 + $0x5c] sm:$0xf]
    %v354 = vld [vmem:[#allocation8 + $0x60] sm:$0xff]
    %v355 = vld [vmem:[#allocation8 + $0x68] sm:$0xf]
    %v356 = vld [vmem:[#allocation8 + $0x6c] sm:$0xff]
    %v357 = vld [vmem:[#allocation8 + $0x74] sm:$0xf]
    %v358 = vld [vmem:[#allocation8 + $0x78] sm:$0xff]
    %v359 = vld [vmem:[#allocation8 + $0x80] sm:$0xf]
    %v360 = vld [vmem:[#allocation8 + $0x84] sm:$0xff]
    %v361 = vld [vmem:[#allocation8 + $0x8c] sm:$0xf]
    %v362 = vld [vmem:[#allocation8 + $0x90] sm:$0xff]
    %v363 = vld [vmem:[#allocation8 + $0x98] sm:$0xf]
    %v364 = vld [vmem:[#allocation8 + $0x9c] sm:$0xff]
    %v365 = vld [vmem:[#allocation8 + $0xa4] sm:$0xf]
    %v366 = vld [vmem:[#allocation8 + $0xa8] sm:$0xff]
    %v367 = vld [vmem:[#allocation8 + $0xb0] sm:$0xf]
    %v368 = vld [vmem:[#allocation8 + $0xb4] sm:$0xff]
    %v369 = vld [vmem:[#allocation8 + $0xbc] sm:$0xf]
    %v370 = vld [vmem:[#allocation8 + $0xc0] sm:$0xff]
    %v371 = vld [vmem:[#allocation8 + $0xc8] sm:$0xf]
    %v372 = vld [vmem:[#allocation8 + $0xcc] sm:$0xff]
    %v373 = vld [vmem:[#allocation8 + $0xd4] sm:$0xf]
    %v374 = vld [vmem:[#allocation8 + $0xd8] sm:$0xff]
    %v375 = vld [vmem:[#allocation8 + $0xe0] sm:$0xf]
    %v376 = vld [vmem:[#allocation8 + $0xe4] sm:$0xff]
    %v377 = vld [vmem:[#allocation8 + $0xec] sm:$0xf]
    %v378 = vld [vmem:[#allocation8 + $0xf0] sm:$0xff]
    %v379 = vld [vmem:[#allocation8 + $0xf8] sm:$0xf]
    %v380 = vld [vmem:[#allocation8 + $0xfc] sm:$0xff]
    %v381 = vld [vmem:[#allocation8 + $0x104] sm:$0xf]
    %v382 = vld [vmem:[#allocation8 + $0x108] sm:$0xff]
    %v383 = vld [vmem:[#allocation8 + $0x110] sm:$0xf]
    %v384 = vld [vmem:[#allocation8 + $0x114] sm:$0xff]
    %v385 = vld [vmem:[#allocation8 + $0x11c] sm:$0xf]
    %v386 = vld [vmem:[#allocation8 + $0x120] sm:$0xff]
    %v387 = vld [vmem:[#allocation8 + $0x128] sm:$0xf]
    %v388 = vld [vmem:[#allocation8 + $0x12c] sm:$0xff]
    %v389 = vld [vmem:[#allocation8 + $0x134] sm:$0xf]
    %v390 = vld [vmem:[#allocation8 + $0x138] sm:$0xff]
    %v391 = vld [vmem:[#allocation8 + $0x140] sm:$0xf]
    %v392 = vld [vmem:[#allocation8 + $0x144] sm:$0xff]
    %v393 = vld [vmem:[#allocation8 + $0x14c] sm:$0xf]
    %v394 = vld [vmem:[#allocation8 + $0x150] sm:$0xff]
    %v395 = vld [vmem:[#allocation8 + $0x158] sm:$0xf]
    %v396 = vld [vmem:[#allocation8 + $0x15c] sm:$0xff]
    %v397 = vld [vmem:[#allocation8 + $0x164] sm:$0xf]
    %v398 = vld [vmem:[#allocation8 + $0x168] sm:$0xff]
    %v399 = vld [vmem:[#allocation8 + $0x170] sm:$0xf]
    %v400 = vld [vmem:[#allocation8 + $0x174] sm:$0xff]
    %v401 = vld [vmem:[#allocation8 + $0x17c] sm:$0xf]
    %v402 = vld [vmem:[#allocation8 + $0x180] sm:$0xff]
    %v403 = vld [vmem:[#allocation8 + $0x188] sm:$0xf]
    %v404 = vld [vmem:[#allocation8 + $0x18c] sm:$0xff]
    %v405 = vld [vmem:[#allocation8 + $0x194] sm:$0xf]
    %v406 = vld [vmem:[#allocation8 + $0x198] sm:$0xff]
    %v407 = vld [vmem:[#allocation8 + $0x1a0] sm:$0xf]
    %v408 = vld [vmem:[#allocation8 + $0x1a4] sm:$0xff]
    %v409 = vld [vmem:[#allocation8 + $0x1ac] sm:$0xf]
    %v410 = vld [vmem:[#allocation8 + $0x1b0] sm:$0xff]
    %v411 = vld [vmem:[#allocation8 + $0x1b8] sm:$0xf]
    %v412 = vld [vmem:[#allocation8 + $0x1bc] sm:$0xff]
    %v413 = vld [vmem:[#allocation8 + $0x1c4] sm:$0xf]
    %v414 = vld [vmem:[#allocation8 + $0x1c8] sm:$0xff]
    %v415 = vld [vmem:[#allocation8 + $0x1d0] sm:$0xf]
    %v416 = vld [vmem:[#allocation8 + $0x1d4] sm:$0xff]
    %v417 = vld [vmem:[#allocation8 + $0x1dc] sm:$0xf]
    %v418 = vld [vmem:[#allocation8 + $0x1e0] sm:$0xff]
    %v419 = vld [vmem:[#allocation8 + $0x1e8] sm:$0xf]
    %v420 = vld [vmem:[#allocation8 + $0x1ec] sm:$0xff]
    %v421 = vld [vmem:[#allocation8 + $0x1f4] sm:$0xf]
    %v422 = vld [vmem:[#allocation8 + $0x1f8] sm:$0xff]
    %v423 = vld [vmem:[#allocation8 + $0x200] sm:$0xf]
    %v424 = vld [vmem:[#allocation8 + $0x204] sm:$0xff]
    %v425 = vld [vmem:[#allocation8 + $0x20c] sm:$0xf]
    %v426 = vld [vmem:[#allocation8 + $0x210] sm:$0xff]
    %v427 = vld [vmem:[#allocation8 + $0x218] sm:$0xf]
    %v428 = vld [vmem:[#allocation8 + $0x21c] sm:$0xff]
    %v429 = vld [vmem:[#allocation8 + $0x224] sm:$0xf]
    %v430 = vld [vmem:[#allocation8 + $0x228] sm:$0xff]
    %v431 = vld [vmem:[#allocation8 + $0x230] sm:$0xf]
    %v432 = vld [vmem:[#allocation8 + $0x234] sm:$0xff]
    %v433 = vld [vmem:[#allocation8 + $0x23c] sm:$0xf]
    %v434 = vld [vmem:[%s4] sm:$0x7]
    %v436 = vperm.slane %v434, 0
    %v437 = vperm.slane %v434, 1
    %v438 = vperm.slane %v434, 2
    %v538 = vunpack.c.l.b16 %v338
    %v539 = vunpack.c.h.b16 %v338
    %v540 = vunpack.c.l.b16 %v339
    %v541 = vunpack.c.l.b16 %v340
    %v542 = vunpack.c.h.b16 %v340
    %v543 = vunpack.c.l.b16 %v341
    %v544 = vunpack.c.l.b16 %v342
    %v545 = vunpack.c.h.b16 %v342
    %v546 = vunpack.c.l.b16 %v343
    %v547 = vunpack.c.l.b16 %v344
    %v548 = vunpack.c.h.b16 %v344
    %v549 = vunpack.c.l.b16 %v345
    %v550 = vunpack.c.l.b16 %v346
    %v551 = vunpack.c.h.b16 %v346
    %v552 = vunpack.c.l.b16 %v347
    %v553 = vunpack.c.l.b16 %v348
    %v554 = vunpack.c.h.b16 %v348
    %v555 = vunpack.c.l.b16 %v349
    %v556 = vunpack.c.l.b16 %v350
    %v557 = vunpack.c.h.b16 %v350
    %v558 = vunpack.c.l.b16 %v351
    %v559 = vunpack.c.l.b16 %v352
    %v560 = vunpack.c.h.b16 %v352
    %v561 = vunpack.c.l.b16 %v353
    %v562 = vunpack.c.l.b16 %v354
    %v563 = vunpack.c.h.b16 %v354
    %v564 = vunpack.c.l.b16 %v355
    %v565 = vunpack.c.l.b16 %v356
    %v566 = vunpack.c.h.b16 %v356
    %v567 = vunpack.c.l.b16 %v357
    %v568 = vunpack.c.l.b16 %v358
    %v569 = vunpack.c.h.b16 %v358
    %v570 = vunpack.c.l.b16 %v359
    %v571 = vunpack.c.l.b16 %v360
    %v572 = vunpack.c.h.b16 %v360
    %v573 = vunpack.c.l.b16 %v361
    %v574 = vunpack.c.l.b16 %v362
    %v575 = vunpack.c.h.b16 %v362
    %v576 = vunpack.c.l.b16 %v363
    %v577 = vunpack.c.l.b16 %v364
    %v578 = vunpack.c.h.b16 %v364
    %v579 = vunpack.c.l.b16 %v365
    %v580 = vunpack.c.l.b16 %v366
    %v581 = vunpack.c.h.b16 %v366
    %v582 = vunpack.c.l.b16 %v367
    %v583 = vunpack.c.l.b16 %v368
    %v584 = vunpack.c.h.b16 %v368
    %v585 = vunpack.c.l.b16 %v369
    %v586 = vunpack.c.l.b16 %v370
    %v587 = vunpack.c.h.b16 %v370
    %v588 = vunpack.c.l.b16 %v371
    %v589 = vunpack.c.l.b16 %v372
    %v590 = vunpack.c.h.b16 %v372
    %v591 = vunpack.c.l.b16 %v373
    %v592 = vunpack.c.l.b16 %v374
    %v593 = vunpack.c.h.b16 %v374
    %v594 = vunpack.c.l.b16 %v375
    %v595 = vunpack.c.l.b16 %v376
    %v596 = vunpack.c.h.b16 %v376
    %v597 = vunpack.c.l.b16 %v377
    %v598 = vunpack.c.l.b16 %v378
    %v599 = vunpack.c.h.b16 %v378
    %v600 = vunpack.c.l.b16 %v379
    %v601 = vunpack.c.l.b16 %v380
    %v602 = vunpack.c.h.b16 %v380
    %v603 = vunpack.c.l.b16 %v381
    %v604 = vunpack.c.l.b16 %v382
    %v605 = vunpack.c.h.b16 %v382
    %v606 = vunpack.c.l.b16 %v383
    %v607 = vunpack.c.l.b16 %v384
    %v608 = vunpack.c.h.b16 %v384
    %v609 = vunpack.c.l.b16 %v385
    %v610 = vunpack.c.l.b16 %v386
    %v611 = vunpack.c.h.b16 %v386
    %v612 = vunpack.c.l.b16 %v387
    %v613 = vunpack.c.l.b16 %v388
    %v614 = vunpack.c.h.b16 %v388
    %v615 = vunpack.c.l.b16 %v389
    %v616 = vunpack.c.l.b16 %v390
    %v617 = vunpack.c.h.b16 %v390
    %v618 = vunpack.c.l.b16 %v391
    %v619 = vunpack.c.l.b16 %v392
    %v620 = vunpack.c.h.b16 %v392
    %v621 = vunpack.c.l.b16 %v393
    %v622 = vunpack.c.l.b16 %v394
    %v623 = vunpack.c.h.b16 %v394
    %v624 = vunpack.c.l.b16 %v395
    %v625 = vunpack.c.l.b16 %v396
    %v626 = vunpack.c.h.b16 %v396
    %v627 = vunpack.c.l.b16 %v397
    %v628 = vunpack.c.l.b16 %v398
    %v629 = vunpack.c.h.b16 %v398
    %v630 = vunpack.c.l.b16 %v399
    %v631 = vunpack.c.l.b16 %v400
    %v632 = vunpack.c.h.b16 %v400
    %v633 = vunpack.c.l.b16 %v401
    %v634 = vunpack.c.l.b16 %v402
    %v635 = vunpack.c.h.b16 %v402
    %v636 = vunpack.c.l.b16 %v403
    %v637 = vunpack.c.l.b16 %v404
    %v638 = vunpack.c.h.b16 %v404
    %v639 = vunpack.c.l.b16 %v405
    %v640 = vunpack.c.l.b16 %v406
    %v641 = vunpack.c.h.b16 %v406
    %v642 = vunpack.c.l.b16 %v407
    %v643 = vunpack.c.l.b16 %v408
    %v644 = vunpack.c.h.b16 %v408
    %v645 = vunpack.c.l.b16 %v409
    %v646 = vunpack.c.l.b16 %v410
    %v647 = vunpack.c.h.b16 %v410
    %v648 = vunpack.c.l.b16 %v411
    %v649 = vunpack.c.l.b16 %v412
    %v650 = vunpack.c.h.b16 %v412
    %v651 = vunpack.c.l.b16 %v413
    %v652 = vunpack.c.l.b16 %v414
    %v653 = vunpack.c.h.b16 %v414
    %v654 = vunpack.c.l.b16 %v415
    %v655 = vunpack.c.l.b16 %v416
    %v656 = vunpack.c.h.b16 %v416
    %v657 = vunpack.c.l.b16 %v417
    %v658 = vunpack.c.l.b16 %v418
    %v659 = vunpack.c.h.b16 %v418
    %v660 = vunpack.c.l.b16 %v419
    %v661 = vunpack.c.l.b16 %v420
    %v662 = vunpack.c.h.b16 %v420
    %v663 = vunpack.c.l.b16 %v421
    %v664 = vunpack.c.l.b16 %v422
    %v665 = vunpack.c.h.b16 %v422
    %v666 = vunpack.c.l.b16 %v423
    %v667 = vunpack.c.l.b16 %v424
    %v668 = vunpack.c.h.b16 %v424
    %v669 = vunpack.c.l.b16 %v425
    %v670 = vunpack.c.l.b16 %v426
    %v671 = vunpack.c.h.b16 %v426
    %v672 = vunpack.c.l.b16 %v427
    %v673 = vunpack.c.l.b16 %v428
    %v674 = vunpack.c.h.b16 %v428
    %v675 = vunpack.c.l.b16 %v429
    %v676 = vunpack.c.l.b16 %v430
    %v677 = vunpack.c.h.b16 %v430
    %v678 = vunpack.c.l.b16 %v431
    %v679 = vunpack.c.l.b16 %v432
    %v680 = vunpack.c.h.b16 %v432
    %v681 = vunpack.c.l.b16 %v433
    %v682 = vpack.c.b16 %v541, %v538
    %v683 = vpack.c.b16 %v542, %v539
    %v684 = vpack.c.b16 %v543, %v540
    %v685 = vpack.c.b16 %v547, %v544
    %v686 = vpack.c.b16 %v548, %v545
    %v687 = vpack.c.b16 %v549, %v546
    %v688 = vpack.c.b16 %v553, %v550
    %v689 = vpack.c.b16 %v554, %v551
    %v690 = vpack.c.b16 %v555, %v552
    %v691 = vpack.c.b16 %v559, %v556
    %v692 = vpack.c.b16 %v560, %v557
    %v693 = vpack.c.b16 %v561, %v558
    %v694 = vpack.c.b16 %v565, %v562
    %v695 = vpack.c.b16 %v566, %v563
    %v696 = vpack.c.b16 %v567, %v564
    %v697 = vpack.c.b16 %v571, %v568
    %v698 = vpack.c.b16 %v572, %v569
    %v699 = vpack.c.b16 %v573, %v570
    %v700 = vpack.c.b16 %v577, %v574
    %v701 = vpack.c.b16 %v578, %v575
    %v702 = vpack.c.b16 %v579, %v576
    %v703 = vpack.c.b16 %v583, %v580
    %v704 = vpack.c.b16 %v584, %v581
    %v705 = vpack.c.b16 %v585, %v582
    %v706 = vpack.c.b16 %v589, %v586
    %v707 = vpack.c.b16 %v590, %v587
    %v708 = vpack.c.b16 %v591, %v588
    %v709 = vpack.c.b16 %v595, %v592
    %v710 = vpack.c.b16 %v596, %v593
    %v711 = vpack.c.b16 %v597, %v594
    %v712 = vpack.c.b16 %v601, %v598
    %v713 = vpack.c.b16 %v602, %v599
    %v714 = vpack.c.b16 %v603, %v600
    %v715 = vpack.c.b16 %v607, %v604
    %v716 = vpack.c.b16 %v608, %v605
    %v717 = vpack.c.b16 %v609, %v606
    %v718 = vpack.c.b16 %v613, %v610
    %v719 = vpack.c.b16 %v614, %v611
    %v720 = vpack.c.b16 %v615, %v612
    %v721 = vpack.c.b16 %v619, %v616
    %v722 = vpack.c.b16 %v620, %v617
    %v723 = vpack.c.b16 %v621, %v618
    %v724 = vpack.c.b16 %v625, %v622
    %v725 = vpack.c.b16 %v626, %v623
    %v726 = vpack.c.b16 %v627, %v624
    %v727 = vpack.c.b16 %v631, %v628
    %v728 = vpack.c.b16 %v632, %v629
    %v729 = vpack.c.b16 %v633, %v630
    %v730 = vpack.c.b16 %v637, %v634
    %v731 = vpack.c.b16 %v638, %v635
    %v732 = vpack.c.b16 %v639, %v636
    %v733 = vpack.c.b16 %v643, %v640
    %v734 = vpack.c.b16 %v644, %v641
    %v735 = vpack.c.b16 %v645, %v642
    %v736 = vpack.c.b16 %v649, %v646
    %v737 = vpack.c.b16 %v650, %v647
    %v738 = vpack.c.b16 %v651, %v648
    %v739 = vpack.c.b16 %v655, %v652
    %v740 = vpack.c.b16 %v656, %v653
    %v741 = vpack.c.b16 %v657, %v654
    %v742 = vpack.c.b16 %v661, %v658
    %v743 = vpack.c.b16 %v662, %v659
    %v744 = vpack.c.b16 %v663, %v660
    %v745 = vpack.c.b16 %v667, %v664
    %v746 = vpack.c.b16 %v668, %v665
    %v747 = vpack.c.b16 %v669, %v666
    %v748 = vpack.c.b16 %v673, %v670
    %v749 = vpack.c.b16 %v674, %v671
    %v750 = vpack.c.b16 %v675, %v672
    %v751 = vpack.c.b16 %v679, %v676
    %v752 = vpack.c.b16 %v680, %v677
    %v753 = vpack.c.b16 %v681, %v678
    %826 = vmatpush.bf16.msra.mxu0 %v703
    %827 = vmatpush.bf16.msra.mxu0 %v700
    %828 = vmatpush.bf16.msra.mxu0 %v697
    %829 = vmatpush.bf16.msra.mxu0 %v694
    %830 = vmatpush.bf16.msra.mxu0 %v691
    %831 = vmatpush.bf16.msra.mxu0 %v688
    %832 = vmatpush.bf16.msra.mxu0 %v685
    %833 = vmatpush.bf16.msra.mxu0 %v682
    %834 = vmatmul.bf16.gmra.mxu0 %v335
    %v835 = vpop.f32.mrf.mxu0
    %v836 = vadd.f32 %v436, %v835
    %v837 = vpop.f32.mrf.mxu0
    %838 = vdwg.mxu0
    %839 = vmatpush.bf16.msra.mxu0 %v727
    %840 = vmatpush.bf16.msra.mxu0 %v724
    %841 = vmatpush.bf16.msra.mxu0 %v721
    %842 = vmatpush.bf16.msra.mxu0 %v718
    %843 = vmatpush.bf16.msra.mxu0 %v715
    %844 = vmatpush.bf16.msra.mxu0 %v712
    %845 = vmatpush.bf16.msra.mxu0 %v709
    %846 = vmatpush.bf16.msra.mxu0 %v706
    %847 = vmatmul.bf16.gmra.mxu0 %v336
    %v848 = vpop.f32.mrf.mxu0
    %v849 = vadd.f32 %v836, %v848
    %v850 = vpop.f32.mrf.mxu0
    %851 = vdwg.mxu0
    %852 = vmatpush.bf16.msra.mxu0 %v751
    %853 = vmatpush.bf16.msra.mxu0 %v748
    %854 = vmatpush.bf16.msra.mxu0 %v745
    %855 = vmatpush.bf16.msra.mxu0 %v742
    %856 = vmatpush.bf16.msra.mxu0 %v739
    %857 = vmatpush.bf16.msra.mxu0 %v736
    %858 = vmatpush.bf16.msra.mxu0 %v733
    %859 = vmatpush.bf16.msra.mxu0 %v730
    %860 = vmatmul.bf16.gmra.mxu0 %v337
    %v861 = vpop.f32.mrf.mxu0
    %v862 = vadd.f32 %v849, %v861
    %v863 = vpop.f32.mrf.mxu0
    %864 = vdwg.mxu0
    %865 = vmatpush.bf16.msra.mxu0 %v704
    %866 = vmatpush.bf16.msra.mxu0 %v701
    %867 = vmatpush.bf16.msra.mxu0 %v698
    %868 = vmatpush.bf16.msra.mxu0 %v695
    %869 = vmatpush.bf16.msra.mxu0 %v692
    %870 = vmatpush.bf16.msra.mxu0 %v689
    %871 = vmatpush.bf16.msra.mxu0 %v686
    %872 = vmatpush.bf16.msra.mxu0 %v683
    %873 = vmatmul.bf16.gmra.mxu0 %v335
    %v874 = vpop.f32.mrf.mxu0
    %v875 = vadd.f32 %v437, %v874
    %v876 = vpop.f32.mrf.mxu0
    %877 = vdwg.mxu0
    %878 = vmatpush.bf16.msra.mxu0 %v728
    %879 = vmatpush.bf16.msra.mxu0 %v725
    %880 = vmatpush.bf16.msra.mxu0 %v722
    %881 = vmatpush.bf16.msra.mxu0 %v719
    %882 = vmatpush.bf16.msra.mxu0 %v716
    %883 = vmatpush.bf16.msra.mxu0 %v713
    %884 = vmatpush.bf16.msra.mxu0 %v710
    %885 = vmatpush.bf16.msra.mxu0 %v707
    %886 = vmatmul.bf16.gmra.mxu0 %v336
    %v887 = vpop.f32.mrf.mxu0
    %v888 = vadd.f32 %v875, %v887
    %v889 = vpop.f32.mrf.mxu0
    %890 = vdwg.mxu0
    %891 = vmatpush.bf16.msra.mxu0 %v752
    %892 = vmatpush.bf16.msra.mxu0 %v749
    %893 = vmatpush.bf16.msra.mxu0 %v746
    %894 = vmatpush.bf16.msra.mxu0 %v743
    %895 = vmatpush.bf16.msra.mxu0 %v740
    %896 = vmatpush.bf16.msra.mxu0 %v737
    %897 = vmatpush.bf16.msra.mxu0 %v734
    %898 = vmatpush.bf16.msra.mxu0 %v731
    %899 = vmatmul.bf16.gmra.mxu0 %v337
    %v900 = vpop.f32.mrf.mxu0
    %v901 = vadd.f32 %v888, %v900
    %v902 = vpop.f32.mrf.mxu0
    %903 = vdwg.mxu0
    %904 = vmatpush.bf16.msra.mxu0 %v705
    %905 = vmatpush.bf16.msra.mxu0 %v702
    %906 = vmatpush.bf16.msra.mxu0 %v699
    %907 = vmatpush.bf16.msra.mxu0 %v696
    %908 = vmatpush.bf16.msra.mxu0 %v693
    %909 = vmatpush.bf16.msra.mxu0 %v690
    %910 = vmatpush.bf16.msra.mxu0 %v687
    %911 = vmatpush.bf16.msra.mxu0 %v684
    %912 = vmatmul.bf16.gmra.mxu0 %v335
    %v913 = vpop.f32.mrf.mxu0
    %v914 = vadd.f32 %v438, %v913
    %v915 = vpop.f32.mrf.mxu0
    %916 = vdwg.mxu0
    %917 = vmatpush.bf16.msra.mxu0 %v729
    %918 = vmatpush.bf16.msra.mxu0 %v726
    %919 = vmatpush.bf16.msra.mxu0 %v723
    %920 = vmatpush.bf16.msra.mxu0 %v720
    %921 = vmatpush.bf16.msra.mxu0 %v717
    %922 = vmatpush.bf16.msra.mxu0 %v714
    %923 = vmatpush.bf16.msra.mxu0 %v711
    %924 = vmatpush.bf16.msra.mxu0 %v708
    %925 = vmatmul.bf16.gmra.mxu0 %v336
    %v926 = vpop.f32.mrf.mxu0
    %v927 = vadd.f32 %v914, %v926
    %v928 = vpop.f32.mrf.mxu0
    %929 = vdwg.mxu0
    %930 = vmatpush.bf16.msra.mxu0 %v753
    %931 = vmatpush.bf16.msra.mxu0 %v750
    %932 = vmatpush.bf16.msra.mxu0 %v747
    %933 = vmatpush.bf16.msra.mxu0 %v744
    %934 = vmatpush.bf16.msra.mxu0 %v741
    %935 = vmatpush.bf16.msra.mxu0 %v738
    %936 = vmatpush.bf16.msra.mxu0 %v735
    %937 = vmatpush.bf16.msra.mxu0 %v732
    %938 = vmatmul.bf16.gmra.mxu0 %v337
    %v939 = vpop.f32.mrf.mxu0
    %v940 = vadd.f32 %v927, %v939
    %v941 = vpop.f32.mrf.mxu0
    %942 = vdwg.mxu0
    %v943 = vmax.f32 %v862, 0.0
    %v944 = vmax.f32 %v901, 0.0
    %v945 = vmax.f32 %v940, 0.0
    %v946 = vpack.c.bf16 %v943, %v943
    %v947 = vpack.c.bf16 %v944, %v944
    %v948 = vpack.c.bf16 %v945, %v945
    %v949 = vld [vmem:[#allocation10] sm:$0xff]
    %v950 = vld [vmem:[#allocation10 + $0x8] sm:$0xff]
    %v951 = vld [vmem:[#allocation10 + $0x10] sm:$0xff]
    %v952 = vld [vmem:[#allocation10 + $0x18] sm:$0xff]
    %v953 = vld [vmem:[#allocation10 + $0x20] sm:$0xff]
    %v954 = vld [vmem:[#allocation10 + $0x28] sm:$0xff]
    %v955 = vld [vmem:[#allocation10 + $0x30] sm:$0xff]
    %v956 = vld [vmem:[#allocation10 + $0x38] sm:$0xff]
    %v957 = vld [vmem:[#allocation10 + $0x40] sm:$0xff]
    %v958 = vld [vmem:[#allocation10 + $0x48] sm:$0xff]
    %v959 = vld [vmem:[#allocation10 + $0x50] sm:$0xff]
    %v960 = vld [vmem:[#allocation10 + $0x58] sm:$0xff]
    %v961 = vld [vmem:[#allocation10 + $0x60] sm:$0xff]
    %v962 = vld [vmem:[#allocation10 + $0x68] sm:$0xff]
    %v963 = vld [vmem:[#allocation10 + $0x70] sm:$0xff]
    %v964 = vld [vmem:[#allocation10 + $0x78] sm:$0xff]
    %v965 = vld [vmem:[#allocation10 + $0x80] sm:$0xff]
    %v966 = vld [vmem:[#allocation10 + $0x88] sm:$0xff]
    %v967 = vld [vmem:[#allocation10 + $0x90] sm:$0xff]
    %v968 = vld [vmem:[#allocation10 + $0x98] sm:$0xff]
    %v969 = vld [vmem:[#allocation10 + $0xa0] sm:$0xff]
    %v970 = vld [vmem:[#allocation10 + $0xa8] sm:$0xff]
    %v971 = vld [vmem:[#allocation10 + $0xb0] sm:$0xff]
    %v972 = vld [vmem:[#allocation10 + $0xb8] sm:$0xff]
    %v973 = vld [vmem:[#allocation10 + $0xc0] sm:$0xff]
    %v974 = vld [vmem:[#allocation10 + $0xc8] sm:$0xff]
    %v975 = vld [vmem:[#allocation10 + $0xd0] sm:$0xff]
    %v976 = vld [vmem:[#allocation10 + $0xd8] sm:$0xff]
    %v977 = vld [vmem:[#allocation10 + $0xe0] sm:$0xff]
    %v978 = vld [vmem:[#allocation10 + $0xe8] sm:$0xff]
    %v979 = vld [vmem:[#allocation10 + $0xf0] sm:$0xff]
    %v980 = vld [vmem:[#allocation10 + $0xf8] sm:$0xff]
    %v981 = vld [vmem:[#allocation10 + $0x100] sm:$0xff]
    %v982 = vld [vmem:[#allocation10 + $0x108] sm:$0xff]
    %v983 = vld [vmem:[#allocation10 + $0x110] sm:$0xff]
    %v984 = vld [vmem:[#allocation10 + $0x118] sm:$0xff]
    %v985 = vld [vmem:[#allocation10 + $0x120] sm:$0xff]
    %v986 = vld [vmem:[#allocation10 + $0x128] sm:$0xff]
    %v987 = vld [vmem:[#allocation10 + $0x130] sm:$0xff]
    %v988 = vld [vmem:[#allocation10 + $0x138] sm:$0xff]
    %v989 = vld [vmem:[#allocation10 + $0x140] sm:$0xff]
    %v990 = vld [vmem:[#allocation10 + $0x148] sm:$0xff]
    %v991 = vld [vmem:[#allocation10 + $0x150] sm:$0xff]
    %v992 = vld [vmem:[#allocation10 + $0x158] sm:$0xff]
    %v993 = vld [vmem:[#allocation10 + $0x160] sm:$0xff]
    %v994 = vld [vmem:[#allocation10 + $0x168] sm:$0xff]
    %v995 = vld [vmem:[#allocation10 + $0x170] sm:$0xff]
    %v996 = vld [vmem:[#allocation10 + $0x178] sm:$0xff]
    %v997 = vld [vmem:[%s6] sm:$0x3]
    %v999 = vperm.slane %v997, 0
    %v1000 = vperm.slane %v997, 1
    %v1051 = vunpack.c.l.b16 %v949
    %v1052 = vunpack.c.h.b16 %v949
    %v1053 = vunpack.c.l.b16 %v950
    %v1054 = vunpack.c.h.b16 %v950
    %v1055 = vunpack.c.l.b16 %v951
    %v1056 = vunpack.c.h.b16 %v951
    %v1057 = vunpack.c.l.b16 %v952
    %v1058 = vunpack.c.h.b16 %v952
    %v1059 = vunpack.c.l.b16 %v953
    %v1060 = vunpack.c.h.b16 %v953
    %v1061 = vunpack.c.l.b16 %v954
    %v1062 = vunpack.c.h.b16 %v954
    %v1063 = vunpack.c.l.b16 %v955
    %v1064 = vunpack.c.h.b16 %v955
    %v1065 = vunpack.c.l.b16 %v956
    %v1066 = vunpack.c.h.b16 %v956
    %v1067 = vunpack.c.l.b16 %v957
    %v1068 = vunpack.c.h.b16 %v957
    %v1069 = vunpack.c.l.b16 %v958
    %v1070 = vunpack.c.h.b16 %v958
    %v1071 = vunpack.c.l.b16 %v959
    %v1072 = vunpack.c.h.b16 %v959
    %v1073 = vunpack.c.l.b16 %v960
    %v1074 = vunpack.c.h.b16 %v960
    %v1075 = vunpack.c.l.b16 %v961
    %v1076 = vunpack.c.h.b16 %v961
    %v1077 = vunpack.c.l.b16 %v962
    %v1078 = vunpack.c.h.b16 %v962
    %v1079 = vunpack.c.l.b16 %v963
    %v1080 = vunpack.c.h.b16 %v963
    %v1081 = vunpack.c.l.b16 %v964
    %v1082 = vunpack.c.h.b16 %v964
    %v1083 = vunpack.c.l.b16 %v965
    %v1084 = vunpack.c.h.b16 %v965
    %v1085 = vunpack.c.l.b16 %v966
    %v1086 = vunpack.c.h.b16 %v966
    %v1087 = vunpack.c.l.b16 %v967
    %v1088 = vunpack.c.h.b16 %v967
    %v1089 = vunpack.c.l.b16 %v968
    %v1090 = vunpack.c.h.b16 %v968
    %v1091 = vunpack.c.l.b16 %v969
    %v1092 = vunpack.c.h.b16 %v969
    %v1093 = vunpack.c.l.b16 %v970
    %v1094 = vunpack.c.h.b16 %v970
    %v1095 = vunpack.c.l.b16 %v971
    %v1096 = vunpack.c.h.b16 %v971
    %v1097 = vunpack.c.l.b16 %v972
    %v1098 = vunpack.c.h.b16 %v972
    %v1099 = vunpack.c.l.b16 %v973
    %v1100 = vunpack.c.h.b16 %v973
    %v1101 = vunpack.c.l.b16 %v974
    %v1102 = vunpack.c.h.b16 %v974
    %v1103 = vunpack.c.l.b16 %v975
    %v1104 = vunpack.c.h.b16 %v975
    %v1105 = vunpack.c.l.b16 %v976
    %v1106 = vunpack.c.h.b16 %v976
    %v1107 = vunpack.c.l.b16 %v977
    %v1108 = vunpack.c.h.b16 %v977
    %v1109 = vunpack.c.l.b16 %v978
    %v1110 = vunpack.c.h.b16 %v978
    %v1111 = vunpack.c.l.b16 %v979
    %v1112 = vunpack.c.h.b16 %v979
    %v1113 = vunpack.c.l.b16 %v980
    %v1114 = vunpack.c.h.b16 %v980
    %v1115 = vunpack.c.l.b16 %v981
    %v1116 = vunpack.c.h.b16 %v981
    %v1117 = vunpack.c.l.b16 %v982
    %v1118 = vunpack.c.h.b16 %v982
    %v1119 = vunpack.c.l.b16 %v983
    %v1120 = vunpack.c.h.b16 %v983
    %v1121 = vunpack.c.l.b16 %v984
    %v1122 = vunpack.c.h.b16 %v984
    %v1123 = vunpack.c.l.b16 %v985
    %v1124 = vunpack.c.h.b16 %v985
    %v1125 = vunpack.c.l.b16 %v986
    %v1126 = vunpack.c.h.b16 %v986
    %v1127 = vunpack.c.l.b16 %v987
    %v1128 = vunpack.c.h.b16 %v987
    %v1129 = vunpack.c.l.b16 %v988
    %v1130 = vunpack.c.h.b16 %v988
    %v1131 = vunpack.c.l.b16 %v989
    %v1132 = vunpack.c.h.b16 %v989
    %v1133 = vunpack.c.l.b16 %v990
    %v1134 = vunpack.c.h.b16 %v990
    %v1135 = vunpack.c.l.b16 %v991
    %v1136 = vunpack.c.h.b16 %v991
    %v1137 = vunpack.c.l.b16 %v992
    %v1138 = vunpack.c.h.b16 %v992
    %v1139 = vunpack.c.l.b16 %v993
    %v1140 = vunpack.c.h.b16 %v993
    %v1141 = vunpack.c.l.b16 %v994
    %v1142 = vunpack.c.h.b16 %v994
    %v1143 = vunpack.c.l.b16 %v995
    %v1144 = vunpack.c.h.b16 %v995
    %v1145 = vunpack.c.l.b16 %v996
    %v1146 = vunpack.c.h.b16 %v996
    %v1147 = vpack.c.b16 %v1053, %v1051
    %v1148 = vpack.c.b16 %v1054, %v1052
    %v1149 = vpack.c.b16 %v1057, %v1055
    %v1150 = vpack.c.b16 %v1058, %v1056
    %v1151 = vpack.c.b16 %v1061, %v1059
    %v1152 = vpack.c.b16 %v1062, %v1060
    %v1153 = vpack.c.b16 %v1065, %v1063
    %v1154 = vpack.c.b16 %v1066, %v1064
    %v1155 = vpack.c.b16 %v1069, %v1067
    %v1156 = vpack.c.b16 %v1070, %v1068
    %v1157 = vpack.c.b16 %v1073, %v1071
    %v1158 = vpack.c.b16 %v1074, %v1072
    %v1159 = vpack.c.b16 %v1077, %v1075
    %v1160 = vpack.c.b16 %v1078, %v1076
    %v1161 = vpack.c.b16 %v1081, %v1079
    %v1162 = vpack.c.b16 %v1082, %v1080
    %v1163 = vpack.c.b16 %v1085, %v1083
    %v1164 = vpack.c.b16 %v1086, %v1084
    %v1165 = vpack.c.b16 %v1089, %v1087
    %v1166 = vpack.c.b16 %v1090, %v1088
    %v1167 = vpack.c.b16 %v1093, %v1091
    %v1168 = vpack.c.b16 %v1094, %v1092
    %v1169 = vpack.c.b16 %v1097, %v1095
    %v1170 = vpack.c.b16 %v1098, %v1096
    %v1171 = vpack.c.b16 %v1101, %v1099
    %v1172 = vpack.c.b16 %v1102, %v1100
    %v1173 = vpack.c.b16 %v1105, %v1103
    %v1174 = vpack.c.b16 %v1106, %v1104
    %v1175 = vpack.c.b16 %v1109, %v1107
    %v1176 = vpack.c.b16 %v1110, %v1108
    %v1177 = vpack.c.b16 %v1113, %v1111
    %v1178 = vpack.c.b16 %v1114, %v1112
    %v1179 = vpack.c.b16 %v1117, %v1115
    %v1180 = vpack.c.b16 %v1118, %v1116
    %v1181 = vpack.c.b16 %v1121, %v1119
    %v1182 = vpack.c.b16 %v1122, %v1120
    %v1183 = vpack.c.b16 %v1125, %v1123
    %v1184 = vpack.c.b16 %v1126, %v1124
    %v1185 = vpack.c.b16 %v1129, %v1127
    %v1186 = vpack.c.b16 %v1130, %v1128
    %v1187 = vpack.c.b16 %v1133, %v1131
    %v1188 = vpack.c.b16 %v1134, %v1132
    %v1189 = vpack.c.b16 %v1137, %v1135
    %v1190 = vpack.c.b16 %v1138, %v1136
    %v1191 = vpack.c.b16 %v1141, %v1139
    %v1192 = vpack.c.b16 %v1142, %v1140
    %v1193 = vpack.c.b16 %v1145, %v1143
    %v1194 = vpack.c.b16 %v1146, %v1144
    %1243 = vmatpush.bf16.msra.mxu0 %v1161
    %1244 = vmatpush.bf16.msra.mxu0 %v1159
    %1245 = vmatpush.bf16.msra.mxu0 %v1157
    %1246 = vmatpush.bf16.msra.mxu0 %v1155
    %1247 = vmatpush.bf16.msra.mxu0 %v1153
    %1248 = vmatpush.bf16.msra.mxu0 %v1151
    %1249 = vmatpush.bf16.msra.mxu0 %v1149
    %1250 = vmatpush.bf16.msra.mxu0 %v1147
    %1251 = vmatmul.bf16.gmra.mxu0 %v946
    %v1252 = vpop.f32.mrf.mxu0
    %v1253 = vadd.f32 %v999, %v1252
    %v1254 = vpop.f32.mrf.mxu0
    %1255 = vdwg.mxu0
    %1256 = vmatpush.bf16.msra.mxu0 %v1177
    %1257 = vmatpush.bf16.msra.mxu0 %v1175
    %1258 = vmatpush.bf16.msra.mxu0 %v1173
    %1259 = vmatpush.bf16.msra.mxu0 %v1171
    %1260 = vmatpush.bf16.msra.mxu0 %v1169
    %1261 = vmatpush.bf16.msra.mxu0 %v1167
    %1262 = vmatpush.bf16.msra.mxu0 %v1165
    %1263 = vmatpush.bf16.msra.mxu0 %v1163
    %1264 = vmatmul.bf16.gmra.mxu0 %v947
    %v1265 = vpop.f32.mrf.mxu0
    %v1266 = vadd.f32 %v1253, %v1265
    %v1267 = vpop.f32.mrf.mxu0
    %1268 = vdwg.mxu0
    %1269 = vmatpush.bf16.msra.mxu0 %v1193
    %1270 = vmatpush.bf16.msra.mxu0 %v1191
    %1271 = vmatpush.bf16.msra.mxu0 %v1189
    %1272 = vmatpush.bf16.msra.mxu0 %v1187
    %1273 = vmatpush.bf16.msra.mxu0 %v1185
    %1274 = vmatpush.bf16.msra.mxu0 %v1183
    %1275 = vmatpush.bf16.msra.mxu0 %v1181
    %1276 = vmatpush.bf16.msra.mxu0 %v1179
    %1277 = vmatmul.bf16.gmra.mxu0 %v948
    %v1278 = vpop.f32.mrf.mxu0
    %v1279 = vadd.f32 %v1266, %v1278
    %v1280 = vpop.f32.mrf.mxu0
    %1281 = vdwg.mxu0
    %1282 = vmatpush.bf16.msra.mxu0 %v1162
    %1283 = vmatpush.bf16.msra.mxu0 %v1160
    %1284 = vmatpush.bf16.msra.mxu0 %v1158
    %1285 = vmatpush.bf16.msra.mxu0 %v1156
    %1286 = vmatpush.bf16.msra.mxu0 %v1154
    %1287 = vmatpush.bf16.msra.mxu0 %v1152
    %1288 = vmatpush.bf16.msra.mxu0 %v1150
    %1289 = vmatpush.bf16.msra.mxu0 %v1148
    %1290 = vmatmul.bf16.gmra.mxu0 %v946
    %v1291 = vpop.f32.mrf.mxu0
    %v1292 = vadd.f32 %v1000, %v1291
    %v1293 = vpop.f32.mrf.mxu0
    %1294 = vdwg.mxu0
    %1295 = vmatpush.bf16.msra.mxu0 %v1178
    %1296 = vmatpush.bf16.msra.mxu0 %v1176
    %1297 = vmatpush.bf16.msra.mxu0 %v1174
    %1298 = vmatpush.bf16.msra.mxu0 %v1172
    %1299 = vmatpush.bf16.msra.mxu0 %v1170
    %1300 = vmatpush.bf16.msra.mxu0 %v1168
    %1301 = vmatpush.bf16.msra.mxu0 %v1166
    %1302 = vmatpush.bf16.msra.mxu0 %v1164
    %1303 = vmatmul.bf16.gmra.mxu0 %v947
    %v1304 = vpop.f32.mrf.mxu0
    %v1305 = vadd.f32 %v1292, %v1304
    %v1306 = vpop.f32.mrf.mxu0
    %1307 = vdwg.mxu0
    %1308 = vmatpush.bf16.msra.mxu0 %v1194
    %1309 = vmatpush.bf16.msra.mxu0 %v1192
    %1310 = vmatpush.bf16.msra.mxu0 %v1190
    %1311 = vmatpush.bf16.msra.mxu0 %v1188
    %1312 = vmatpush.bf16.msra.mxu0 %v1186
    %1313 = vmatpush.bf16.msra.mxu0 %v1184
    %1314 = vmatpush.bf16.msra.mxu0 %v1182
    %1315 = vmatpush.bf16.msra.mxu0 %v1180
    %1316 = vmatmul.bf16.gmra.mxu0 %v948
    %v1317 = vpop.f32.mrf.mxu0
    %v1318 = vadd.f32 %v1305, %v1317
    %v1319 = vpop.f32.mrf.mxu0
    %1320 = vdwg.mxu0
    %v1321 = vmax.f32 %v1279, 0.0
    %v1322 = vmax.f32 %v1318, 0.0
    %v1323 = vpack.c.bf16 %v1321, %v1321
    %v1324 = vpack.c.bf16 %v1322, %v1322
    %v1325 = vld [vmem:[#allocation11] sm:$0xf]
    %v1326 = vld [vmem:[#allocation11 + $0x4] sm:$0xf]
    %v1327 = vld [vmem:[#allocation11 + $0x8] sm:$0xf]
    %v1328 = vld [vmem:[#allocation11 + $0xc] sm:$0xf]
    %v1329 = vld [vmem:[#allocation11 + $0x10] sm:$0xf]
    %v1330 = vld [vmem:[#allocation11 + $0x14] sm:$0xf]
    %v1331 = vld [vmem:[#allocation11 + $0x18] sm:$0xf]
    %v1332 = vld [vmem:[#allocation11 + $0x1c] sm:$0xf]
    %v1333 = vld [vmem:[#allocation11 + $0x20] sm:$0xf]
    %v1334 = vld [vmem:[#allocation11 + $0x24] sm:$0xf]
    %v1335 = vld [vmem:[#allocation11 + $0x28] sm:$0xf]
    %v1336 = vld [vmem:[#allocation11 + $0x2c] sm:$0xf]
    %v1337 = vld [vmem:[#allocation11 + $0x30] sm:$0xf]
    %v1338 = vld [vmem:[#allocation11 + $0x34] sm:$0xf]
    %v1339 = vld [vmem:[#allocation11 + $0x38] sm:$0xf]
    %v1340 = vld [vmem:[#allocation11 + $0x3c] sm:$0xf]
    %v1341 = vld [vmem:[#allocation11 + $0x40] sm:$0xf]
    %v1342 = vld [vmem:[#allocation11 + $0x44] sm:$0xf]
    %v1343 = vld [vmem:[#allocation11 + $0x48] sm:$0xf]
    %v1344 = vld [vmem:[#allocation11 + $0x4c] sm:$0xf]
    %v1345 = vld [vmem:[#allocation11 + $0x50] sm:$0xf]
    %v1346 = vld [vmem:[#allocation11 + $0x54] sm:$0xf]
    %v1347 = vld [vmem:[#allocation11 + $0x58] sm:$0xf]
    %v1348 = vld [vmem:[#allocation11 + $0x5c] sm:$0xf]
    %v1349 = vld [vmem:[#allocation11 + $0x60] sm:$0xf]
    %v1350 = vld [vmem:[#allocation11 + $0x64] sm:$0xf]
    %v1351 = vld [vmem:[#allocation11 + $0x68] sm:$0xf]
    %v1352 = vld [vmem:[#allocation11 + $0x6c] sm:$0xf]
    %v1353 = vld [vmem:[#allocation11 + $0x70] sm:$0xf]
    %v1354 = vld [vmem:[#allocation11 + $0x74] sm:$0xf]
    %v1355 = vld [vmem:[#allocation11 + $0x78] sm:$0xf]
    %v1356 = vld [vmem:[#allocation11 + $0x7c] sm:$0xf]
    %v1357 = vld [vmem:[%s8] sm:$0x1]
    %v1359 = vperm.slane %v1357, 0
    %v1393 = vunpack.c.l.b16 %v1325
    %v1394 = vunpack.c.l.b16 %v1326
    %v1395 = vunpack.c.l.b16 %v1327
    %v1396 = vunpack.c.l.b16 %v1328
    %v1397 = vunpack.c.l.b16 %v1329
    %v1398 = vunpack.c.l.b16 %v1330
    %v1399 = vunpack.c.l.b16 %v1331
    %v1400 = vunpack.c.l.b16 %v1332
    %v1401 = vunpack.c.l.b16 %v1333
    %v1402 = vunpack.c.l.b16 %v1334
    %v1403 = vunpack.c.l.b16 %v1335
    %v1404 = vunpack.c.l.b16 %v1336
    %v1405 = vunpack.c.l.b16 %v1337
    %v1406 = vunpack.c.l.b16 %v1338
    %v1407 = vunpack.c.l.b16 %v1339
    %v1408 = vunpack.c.l.b16 %v1340
    %v1409 = vunpack.c.l.b16 %v1341
    %v1410 = vunpack.c.l.b16 %v1342
    %v1411 = vunpack.c.l.b16 %v1343
    %v1412 = vunpack.c.l.b16 %v1344
    %v1413 = vunpack.c.l.b16 %v1345
    %v1414 = vunpack.c.l.b16 %v1346
    %v1415 = vunpack.c.l.b16 %v1347
    %v1416 = vunpack.c.l.b16 %v1348
    %v1417 = vunpack.c.l.b16 %v1349
    %v1418 = vunpack.c.l.b16 %v1350
    %v1419 = vunpack.c.l.b16 %v1351
    %v1420 = vunpack.c.l.b16 %v1352
    %v1421 = vunpack.c.l.b16 %v1353
    %v1422 = vunpack.c.l.b16 %v1354
    %v1423 = vunpack.c.l.b16 %v1355
    %v1424 = vunpack.c.l.b16 %v1356
    %v1425 = vpack.c.b16 %v1394, %v1393
    %v1426 = vpack.c.b16 %v1396, %v1395
    %v1427 = vpack.c.b16 %v1398, %v1397
    %v1428 = vpack.c.b16 %v1400, %v1399
    %v1429 = vpack.c.b16 %v1402, %v1401
    %v1430 = vpack.c.b16 %v1404, %v1403
    %v1431 = vpack.c.b16 %v1406, %v1405
    %v1432 = vpack.c.b16 %v1408, %v1407
    %v1433 = vpack.c.b16 %v1410, %v1409
    %v1434 = vpack.c.b16 %v1412, %v1411
    %v1435 = vpack.c.b16 %v1414, %v1413
    %v1436 = vpack.c.b16 %v1416, %v1415
    %v1437 = vpack.c.b16 %v1418, %v1417
    %v1438 = vpack.c.b16 %v1420, %v1419
    %v1439 = vpack.c.b16 %v1422, %v1421
    %v1440 = vpack.c.b16 %v1424, %v1423
    %1457 = vmatpush.bf16.msra.mxu0 %v1432
    %1458 = vmatpush.bf16.msra.mxu0 %v1431
    %1459 = vmatpush.bf16.msra.mxu0 %v1430
    %1460 = vmatpush.bf16.msra.mxu0 %v1429
    %1461 = vmatpush.bf16.msra.mxu0 %v1428
    %1462 = vmatpush.bf16.msra.mxu0 %v1427
    %1463 = vmatpush.bf16.msra.mxu0 %v1426
    %1464 = vmatpush.bf16.msra.mxu0 %v1425
    %1465 = vmatmul.bf16.gmra.mxu0 %v1323
    %v1466 = vpop.f32.mrf.mxu0
    %v1467 = vadd.f32 %v1359, %v1466
    %v1468 = vpop.f32.mrf.mxu0
    %1469 = vdwg.mxu0
    %1470 = vmatpush.bf16.msra.mxu0 %v1440
    %1471 = vmatpush.bf16.msra.mxu0 %v1439
    %1472 = vmatpush.bf16.msra.mxu0 %v1438
    %1473 = vmatpush.bf16.msra.mxu0 %v1437
    %1474 = vmatpush.bf16.msra.mxu0 %v1436
    %1475 = vmatpush.bf16.msra.mxu0 %v1435
    %1476 = vmatpush.bf16.msra.mxu0 %v1434
    %1477 = vmatpush.bf16.msra.mxu0 %v1433
    %1478 = vmatmul.bf16.gmra.mxu0 %v1324
    %v1479 = vpop.f32.mrf.mxu0
    %v1480 = vadd.f32 %v1467, %v1479
    %v1481 = vpop.f32.mrf.mxu0
    %1482 = vdwg.mxu0
    %v1483 = vlaneseq
    %v1484 = vand.u32 %v1483, 127
    %v1485 = vtanh.pop %v1480
    %v1486 = vxor.u32 %v1480, 2147483648
    %v1487 = vmul.f32 %v1486, 1.442695
    %v1488 = vpow.pop %v1487
    %v1489 = vadd.f32 %v1488, 1.0
    %v1490 = vrcp.pop %v1489
    %v1491 = vmul.f32 %v1489, %v1490
    %v1492 = vsub.f32 1.0, %v1491
    %v1493 = vmul.f32 %v1490, %v1492
    %v1494 = vadd.f32 %v1490, %v1493
    %vm1495 = vweird.f32 %v1489
    %vm1496 = vweird.f32 %v1490
    %vm1497 = vmor %vm1495, %vm1496
    %v1498 = vsel %vm1497, %v1490, %v1494
    %v1499 = vand.u32 2147483647, %v1489
    %vm1500 = vcmp.eq.f32.partialorder %v1499, 8.507059e+37
    %v1501 = vand.u32 %v1489, 2147483648
    %v1502 = vor.u32 1.1754944e-38, %v1501
    %v1503 = vsel %vm1500, %v1502, %v1498
    %v1504 = vmul.f32 1.0, %v1503
    %v1505 = vmul.f32 %v1504, 0.9
    %v1506 = vadd.f32 %v1505, 0.1
    %vm1507 = vcmp.lt.s32.totalorder %v1484, 8
    %v1508 = vsel %vm1507, %v1485, %v1506
    %1509 = vst [vmem:[#allocation13] sm:$0xff] %v1508
    // Predicated region
    $region62: #{tpu_custom_call.1} parent=1 // pred_check
      _
    $region63: #{tpu_custom_call.1} parent=1 // pred_check_branch
      %1511 = sbr.rel (0) target = $region65
    $region64: #{tpu_custom_call.1} parent=1 // pred_region
      %1513 = vsyncadd [#allocation4], 0
      %s1515 = sshll.u32 [#allocation13], 4
      %s1516 = int_to_ptr.vmem [resolvable:$true] %s1515
      %s1517 = sshll.u32 %s9, 4
      %s1518 = int_to_ptr.hbm [resolvable:$true] %s1517
      %1520 = dma.vmem_to_hbm [thread:$0]  %s1516, 128, %s1518, [#allocation4]
    $region65: #{tpu_custom_call.1} parent=1 // pred_fallthru
      _
    // Predicated region
    $region66: #{tpu_custom_call.1} parent=1 // pred_check
      _
    $region67: #{tpu_custom_call.1} parent=1 // pred_check_branch
      %1522 = sbr.rel (0) target = $region69
    $region68: #{tpu_custom_call.1} parent=1 // pred_region
      %1524 = dma.done [#allocation4], 128
    $region69: #{tpu_custom_call.1} parent=1 // pred_fallthru
      _
    %1525 = vsyncpa [#allocation3], 1
    %1526 = vsyncpa [#allocation6], 1
    %1527 = vsyncpa [#allocation9], 1
    %1528 = vsyncpa [#allocation12], 1
    %1529 = vsyncpa [#allocation4], 1

</llo_original>
